<compile_context>
chip_gen: v5e
topology: v5e:2x2
jax: 0.10.0
libtpu: 0.0.40
codegen_flags: <defaults>
</compile_context>

<pallas_src>
import numpy as np
import jax
import jax.numpy as jnp
from jax import lax
from jax.experimental import pallas as pl
from jax.experimental.pallas import tpu as pltpu


def _make_stats_kernel(C: int, tile_n: int, n_valid: int, n_padded: int, square: bool):
    masked = n_padded != n_valid

    def kernel(x_ref, y_ref, bnd_ref, out_ref):
        t = pl.program_id(1)

        x = x_ref[0]          # (C, tile_n) logits
        y = y_ref[0]          # (1, tile_n) int32 labels
        bnd = bnd_ref[0]      # (C, tile_n) distance map

        # softmax over the class (sublane) axis
        m = jnp.max(x, axis=0, keepdims=True)
        e = jnp.exp(x - m)
        s = jnp.sum(e, axis=0, keepdims=True)
        p = e / s

        if masked:
            # zero out contributions from spatial padding
            lane = lax.broadcasted_iota(jnp.int32, (1, tile_n), 1)
            valid = ((t * tile_n + lane) < n_valid).astype(jnp.float32)
            p = p * valid

        # one-hot of the label map (padded labels are -1 -> all-zero one-hot)
        c_iota = lax.broadcasted_iota(jnp.int32, (C, tile_n), 0)
        oh = (c_iota == y).astype(jnp.float32)    # (C, tile_n)

        if square:
            # (p*oh)^2 = p^2*oh, (p*(1-oh))^2 = p^2 - p^2*oh, ((1-p)*oh)^2 = (1-p)^2*oh
            psq = p * p
            tp = jnp.sum(psq * oh, axis=1, keepdims=True)
            fp = jnp.sum(psq, axis=1, keepdims=True) - tp
            fn = jnp.sum((1.0 - p) * (1.0 - p) * oh, axis=1, keepdims=True)
        else:
            tp = jnp.sum(p * oh, axis=1, keepdims=True)
            fp = jnp.sum(p, axis=1, keepdims=True) - tp
            fn = jnp.sum(oh, axis=1, keepdims=True) - tp
        bd = jnp.sum(p * bnd, axis=1, keepdims=True)

        tile = jnp.concatenate([tp, fp, fn, bd], axis=1)   # (C, 4)

        @pl.when(t == 0)
        def _():
            out_ref[...] = jnp.zeros_like(out_ref)

        out_ref[0] = out_ref[0] + tile

    return kernel


def dc_and_bd_loss(net_output, target, bound, *, smooth: float = 1.0,
                   batch_dice: bool = False, do_bg: bool = True,
                   square: bool = False):
    """net_output/bound: (B, C, *spatial) float; target: (B, 1, *spatial) label map.
    Returns scalar float32 loss = soft-dice loss + boundary loss (aggregate='sum')."""
    # TODO(synk): target given as a full one-hot (B, C, ...) tensor and the
    # loss_mask path of get_tp_fp_fn are not implemented (unused by DC_and_BD_loss).
    assert net_output.ndim >= 3 and net_output.shape == bound.shape
    B, C = int(net_output.shape[0]), int(net_output.shape[1])
    spatial = net_output.shape[2:]
    assert target.shape == (B, 1) + tuple(spatial)
    assert C >= 2, "BD loss needs at least one foreground class"
    N = int(np.prod(spatial))

    x = net_output.reshape(B, C, N).astype(jnp.float32)
    bnd = bound.reshape(B, C, N).astype(jnp.float32)
    y = target.reshape(B, 1, N).astype(jnp.int32)

    LANE = 128
    N_pad = -(-N // LANE) * LANE
    if N_pad != N:
        pad = N_pad - N
        x = jnp.pad(x, ((0, 0), (0, 0), (0, pad)))
        bnd = jnp.pad(bnd, ((0, 0), (0, 0), (0, pad)))
        y = jnp.pad(y, ((0, 0), (0, 0), (0, pad)), constant_values=-1)

    tile_n = 128
    for cand in (8192, 4096, 2048, 1024, 512, 256, 128):
        if N_pad % cand == 0:
            tile_n = cand
            break
    num_tiles = N_pad // tile_n

    kernel = _make_stats_kernel(C, tile_n, N, N_pad, square)

    stats = pl.pallas_call(
        kernel,
        out_shape=jax.ShapeDtypeStruct((B, C, 4), jnp.float32),
        grid=(B, num_tiles),
        in_specs=[
            pl.BlockSpec((1, C, tile_n), lambda b, t: (b, 0, t)),   # logits
            pl.BlockSpec((1, 1, tile_n), lambda b, t: (b, 0, t)),   # labels
            pl.BlockSpec((1, C, tile_n), lambda b, t: (b, 0, t)),   # bound
        ],
        out_specs=pl.BlockSpec((1, C, 4), lambda b, t: (b, 0, 0)),  # accumulator
        compiler_params=pltpu.CompilerParams(
            dimension_semantics=("parallel", "arbitrary")),
    )(x, y, bnd)

    tp = stats[:, :, 0]
    fp = stats[:, :, 1]
    fn = stats[:, :, 2]
    bd_sum = stats[:, :, 3]

    if batch_dice:
        tp, fp, fn = tp.sum(0), fp.sum(0), fn.sum(0)
    dc = (2.0 * tp + smooth) / (2.0 * tp + fp + fn + smooth)
    if not do_bg:
        dc = dc[1:] if batch_dice else dc[:, 1:]
    dc_loss = -jnp.mean(dc)

    bd_loss = jnp.sum(bd_sum[:, 1:]) / jnp.float32(B * (C - 1) * N)
    return dc_loss + bd_loss


def _reference_loss(net, target, bound, smooth=1.0, batch_dice=False,
                    do_bg=True, square=False):
    """Pure-numpy (float64) mirror of DC_and_BD_loss.forward."""
    net = net.astype(np.float64)
    bound = bound.astype(np.float64)
    B, C = net.shape[:2]
    m = net.max(axis=1, keepdims=True)
    e = np.exp(net - m)
    sm = e / e.sum(axis=1, keepdims=True)
    lab = target.astype(np.int64)[:, 0]
    oh = np.zeros_like(net)
    for c in range(C):
        oh[:, c] = (lab == c)
    tp = sm * oh
    fp = sm * (1.0 - oh)
    fn = (1.0 - sm) * oh
    if square:
        tp, fp, fn = tp ** 2, fp ** 2, fn ** 2
    axes = tuple(range(2, net.ndim))
    if batch_dice:
        axes = (0,) + axes
    tp, fp, fn = tp.sum(axis=axes), fp.sum(axis=axes), fn.sum(axis=axes)
    dc = (2 * tp + smooth) / (2 * tp + fp + fn + smooth)
    if not do_bg:
        dc = dc[1:] if batch_dice else dc[:, 1:]
    dc_loss = -dc.mean()
    bd_loss = (sm[:, 1:] * bound[:, 1:]).mean()
    return float(dc_loss + bd_loss)


if __name__ == "__main__":
    key = jax.random.PRNGKey(0)
    k1, k2, k3 = jax.random.split(key, 3)

    B, C, X, Y, Z = 2, 4, 8, 8, 8
    net = jax.random.normal(k1, (B, C, X, Y, Z), dtype=jnp.float32)          # logits
    target = jax.random.randint(k2, (B, 1, X, Y, Z), 0, C).astype(jnp.float32)  # label map
    bound = jax.random.normal(k3, (B, C, X, Y, Z), dtype=jnp.float32)        # distance map

    loss = dc_and_bd_loss(net, target, bound)
    loss = jax.block_until_ready(loss)

    ref = _reference_loss(np.asarray(net), np.asarray(target), np.asarray(bound))
    assert np.allclose(float(loss), ref, rtol=1e-3, atol=1e-5), (float(loss), ref)

    print("KERNEL_OK")
</pallas_src>

<mosaic_0001>
module attributes {stable_mosaic.version = 11 : i64} {
  func.func @kernel(%arg0: i32, %arg1: i32, %arg2: memref<1x4x512xf32, #tpu.memory_space<vmem>>, %arg3: memref<1x1x512xi32, #tpu.memory_space<vmem>>, %arg4: memref<1x4x512xf32, #tpu.memory_space<vmem>>, %arg5: memref<1x4x4xf32, #tpu.memory_space<vmem>>) attributes {dimension_semantics = [#tpu.dimension_semantics<parallel>, #tpu.dimension_semantics<arbitrary>], iteration_bounds = array<i64: 2, 1>, scalar_prefetch = 0 : i64, scratch_operands = 0 : i64, tpu.core_type = #tpu.core_type<tc>, window_params = [{transform_indices = @transform_0, window_bounds = array<i64: 1, 4, 512>}, {transform_indices = @transform_1, window_bounds = array<i64: 1, 1, 512>}, {transform_indices = @transform_2, window_bounds = array<i64: 1, 4, 512>}, {transform_indices = @transform_3, window_bounds = array<i64: 1, 4, 4>}]} {
    %c0 = arith.constant 0 : index
    %c0_0 = arith.constant 0 : index
    %c0_1 = arith.constant 0 : index
    %0 = vector.load %arg2[%c0, %c0_0, %c0_1] : memref<1x4x512xf32, #tpu.memory_space<vmem>>, vector<1x4x512xf32>
    %1 = vector.shape_cast %0 : vector<1x4x512xf32> to vector<4x512xf32>
    %c0_2 = arith.constant 0 : index
    %c0_3 = arith.constant 0 : index
    %c0_4 = arith.constant 0 : index
    %2 = vector.load %arg3[%c0_2, %c0_3, %c0_4] : memref<1x1x512xi32, #tpu.memory_space<vmem>>, vector<1x1x512xi32>
    %3 = vector.shape_cast %2 : vector<1x1x512xi32> to vector<1x512xi32>
    %c0_5 = arith.constant 0 : index
    %c0_6 = arith.constant 0 : index
    %c0_7 = arith.constant 0 : index
    %4 = vector.load %arg4[%c0_5, %c0_6, %c0_7] : memref<1x4x512xf32, #tpu.memory_space<vmem>>, vector<1x4x512xf32>
    %5 = vector.shape_cast %4 : vector<1x4x512xf32> to vector<4x512xf32>
    %cst = arith.constant dense<0xFF800000> : vector<512xf32>
    %6 = vector.multi_reduction <maximumf>, %1, %cst [0] : vector<4x512xf32> to vector<512xf32>
    %7 = vector.shape_cast %6 : vector<512xf32> to vector<1x512xf32>
    %8 = vector.broadcast %7 : vector<1x512xf32> to vector<4x512xf32>
    %9 = arith.subf %1, %8 : vector<4x512xf32>
    %10 = math.exp %9 : vector<4x512xf32>
    %cst_8 = arith.constant dense<0.000000e+00> : vector<512xf32>
    %11 = vector.multi_reduction <add>, %10, %cst_8 [0] : vector<4x512xf32> to vector<512xf32>
    %12 = vector.shape_cast %11 : vector<512xf32> to vector<1x512xf32>
    %13 = vector.broadcast %12 : vector<1x512xf32> to vector<4x512xf32>
    %14 = arith.divf %10, %13 : vector<4x512xf32>
    %15 = tpu.iota {dimensions = array<i32: 0>} : vector<4x512xi32>
    %16 = vector.broadcast %3 : vector<1x512xi32> to vector<4x512xi32>
    %17 = arith.cmpi eq, %15, %16 : vector<4x512xi32>
    %18 = arith.extui %17 : vector<4x512xi1> to vector<4x512xi32>
    %19 = arith.sitofp %18 : vector<4x512xi32> to vector<4x512xf32>
    %20 = arith.mulf %14, %19 : vector<4x512xf32>
    %cst_9 = arith.constant dense<0.000000e+00> : vector<4xf32>
    %21 = vector.multi_reduction <add>, %20, %cst_9 [1] : vector<4x512xf32> to vector<4xf32>
    %22 = vector.shape_cast %21 : vector<4xf32> to vector<4x1xf32>
    %cst_10 = arith.constant dense<0.000000e+00> : vector<4xf32>
    %23 = vector.multi_reduction <add>, %14, %cst_10 [1] : vector<4x512xf32> to vector<4xf32>
    %24 = vector.shape_cast %23 : vector<4xf32> to vector<4x1xf32>
    %25 = arith.subf %24, %22 : vector<4x1xf32>
    %cst_11 = arith.constant dense<0.000000e+00> : vector<4xf32>
    %26 = vector.multi_reduction <add>, %19, %cst_11 [1] : vector<4x512xf32> to vector<4xf32>
    %27 = vector.shape_cast %26 : vector<4xf32> to vector<4x1xf32>
    %28 = arith.subf %27, %22 : vector<4x1xf32>
    %29 = arith.mulf %14, %5 : vector<4x512xf32>
    %cst_12 = arith.constant dense<0.000000e+00> : vector<4xf32>
    %30 = vector.multi_reduction <add>, %29, %cst_12 [1] : vector<4x512xf32> to vector<4xf32>
    %31 = vector.shape_cast %30 : vector<4xf32> to vector<4x1xf32>
    %32 = tpu.concatenate %22, %25, %28, %31 in 1 : vector<4x1xf32>, vector<4x1xf32>, vector<4x1xf32>, vector<4x1xf32> -> vector<4x4xf32>
    %c0_i32 = arith.constant 0 : i32
    %33 = arith.cmpi eq, %arg1, %c0_i32 : i32
    %34 = arith.extui %33 : i1 to i32
    %c0_i32_13 = arith.constant 0 : i32
    %35 = arith.cmpi ne, %34, %c0_i32_13 : i32
    scf.if %35 {
      %cst_20 = arith.constant 0.000000e+00 : f32
      %42 = vector.broadcast %cst_20 : f32 to vector<1x4x4xf32>
      %c0_21 = arith.constant 0 : index
      %c0_22 = arith.constant 0 : index
      %c0_23 = arith.constant 0 : index
      %43 = vector.load %arg5[%c0_21, %c0_22, %c0_23] : memref<1x4x4xf32, #tpu.memory_space<vmem>>, vector<1x4x4xf32>
      tpu.vector_store %arg5[%c0_21, %c0_22, %c0_23], %42 {strides = array<i32>} : memref<1x4x4xf32, #tpu.memory_space<vmem>>, vector<1x4x4xf32>,
    } else {
    }
    %c0_14 = arith.constant 0 : index
    %c0_15 = arith.constant 0 : index
    %c0_16 = arith.constant 0 : index
    %36 = vector.load %arg5[%c0_14, %c0_15, %c0_16] : memref<1x4x4xf32, #tpu.memory_space<vmem>>, vector<1x4x4xf32>
    %37 = vector.shape_cast %36 : vector<1x4x4xf32> to vector<4x4xf32>
    %38 = arith.addf %37, %32 : vector<4x4xf32>
    %c0_17 = arith.constant 0 : index
    %c0_18 = arith.constant 0 : index
    %c0_19 = arith.constant 0 : index
    %39 = vector.load %arg5[%c0_17, %c0_18, %c0_19] : memref<1x4x4xf32, #tpu.memory_space<vmem>>, vector<1x4x4xf32>
    %40 = vector.shape_cast %39 : vector<1x4x4xf32> to vector<4x4xf32>
    %41 = vector.shape_cast %38 : vector<4x4xf32> to vector<1x4x4xf32>
    tpu.vector_store %arg5[%c0_17, %c0_18, %c0_19], %41 {strides = array<i32>} : memref<1x4x4xf32, #tpu.memory_space<vmem>>, vector<1x4x4xf32>,
    return
  }
  func.func @transform_0(%arg0: i32, %arg1: i32) -> (i32, i32, i32) {
    %c0_i32 = arith.constant 0 : i32
    %c0_i32_0 = arith.constant 0 : i32
    return %arg0, %c0_i32, %arg1 : i32, i32, i32
  }
  func.func @transform_1(%arg0: i32, %arg1: i32) -> (i32, i32, i32) {
    %c0_i32 = arith.constant 0 : i32
    %c0_i32_0 = arith.constant 0 : i32
    return %arg0, %c0_i32, %arg1 : i32, i32, i32
  }
  func.func @transform_2(%arg0: i32, %arg1: i32) -> (i32, i32, i32) {
    %c0_i32 = arith.constant 0 : i32
    %c0_i32_0 = arith.constant 0 : i32
    return %arg0, %c0_i32, %arg1 : i32, i32, i32
  }
  func.func @transform_3(%arg0: i32, %arg1: i32) -> (i32, i32, i32) {
    %c0_i32 = arith.constant 0 : i32
    %c0_i32_0 = arith.constant 0 : i32
    %c0_i32_1 = arith.constant 0 : i32
    return %arg0, %c0_i32, %c0_i32_0 : i32, i32, i32
  }
}

</mosaic_0001>

<llo_original>
// kernel: tpu_custom_call.1
$region0: #{tpu_custom_call.1}
  #allocation0 [shape = 'u32[]', space=smem, size = 0x4, offset = 0x4, fixed_abs, tag = 'smem constant byte address 0x4 - core index']
  #allocation1 [shape = 'u32[72,128]{1,0:T(1,128)}', space=vmem, size = 0x9000, scoped, tag = 'internal scratch']
  %s0 = inlined_call_operand.hbm [shape: f32[2,4,512], index: 0, kind: input, shape index: {}]
  %s1 = inlined_call_operand.hbm [shape: s32[2,1,512], index: 1, kind: input, shape index: {}]
  %s2 = inlined_call_operand.hbm [shape: f32[2,4,512], index: 2, kind: input, shape index: {}]
  %s3 = inlined_call_operand.hbm [shape: f32[2,4,4], index: 3, kind: output, shape index: {}]
  %s4 = sld [smem:[#allocation0]]
  $region61: #{tpu_custom_call.1} parent=0
    _
  %s6 = ssub.s32 1, %s4
  %s7 = scalar_select 0, %s6, %s4
  $region1: #{tpu_custom_call.1} parent=0
    #allocation2 [shape = 'u8[16384]{0}', space=vmem, size = 0x4000, scoped, tag = 'input window, operand 0']
    #allocation3 [shape = 's32[2]{0}', space=sflag, size = 0x8, scoped, tag = 'scoped memory for tpu_custom_call.1']
    #allocation4 [shape = 's32[2]{0}', space=sflag, size = 0x8, scoped, tag = 'scoped memory for tpu_custom_call.1']
    #allocation5 [shape = 'u8[4096]{0}', space=vmem, size = 0x1000, scoped, tag = 'input window, operand 1']
    #allocation6 [shape = 's32[2]{0}', space=sflag, size = 0x8, scoped, tag = 'scoped memory for tpu_custom_call.1']
    #allocation7 [shape = 'u8[16384]{0}', space=vmem, size = 0x4000, scoped, tag = 'input window, operand 2']
    #allocation8 [shape = 'u8[4096]{0}', space=vmem, size = 0x1000, scoped, tag = 'output window, operand 0']
    %8 = vsyncpa [#allocation3], 0
    %s9 = scalar_lea.sflag [#allocation3], 1
    %10 = vsyncpa %s9, 0
    %11 = vsyncpa [#allocation6], 0
    %s12 = scalar_lea.sflag [#allocation6], 1
    %13 = vsyncpa %s12, 0
    %14 = vsyncpa [#allocation4], 0
    %s15 = scalar_lea.sflag [#allocation4], 1
    %16 = vsyncpa %s15, 0
    loop: start=0, step=1, limit=4
    $region2: #{tpu_custom_call.1} parent=1 // loop_pre_header
      _
    $region3: #{tpu_custom_call.1} parent=1 // loop_header
      %s18 = sphi 0, %s22
      %p19 = scmp.ge.s32.totalorder %s18, 4
      %s25 = sphi 0, %s37
      %s26 = sphi 0, %s33
      %s27 = sphi 0, %s25
      %s28 = sphi 0, %s26
      %s29 = sphi 0, %s27
      %s30 = sphi 0, %s28
      %s42 = sphi 0, %s44
      %s45 = sphi 0, %s42
      %s46 = sphi 0, %s45
      %s62 = sphi 0, %s46
      %s70 = sphi 0, %s72
      %s73 = sphi 0, %s70
      %s74 = sphi 0, %s73
      %s90 = sphi 0, %s74
      %s98 = sphi 0, %s100
      %s101 = sphi 0, %s98
      %s102 = sphi 0, %s101
      %s118 = sphi 0, %s102
      %s124 = sphi 0, %s126
      %s127 = sphi 0, %s124
      %s128 = sphi 0, %s127
      %s144 = sphi 0, %s128
    $region4: #{tpu_custom_call.1} parent=1 // loop_header_branch
      %21 = sbr.rel (%p19) target = $region8
    $region5: #{tpu_custom_call.1} parent=1 // loop_body
      %s23 = ssub.s32 %s18, 1
      %s24 = ssub.s32 %s18, 2
      %s31 = sadd.s32 1, %s26
      %p32 = scmp.ge.s32.totalorder %s31, 1
      %s33 = scalar_select %p32, 0, %s31
      %s34 = sadd.s32 1, %s25
      %s35 = scalar_select %p32, %s34, %s25
      %p36 = scmp.ge.s32.totalorder %s35, 2
      %s37 = scalar_select %p36, 0, %s35
      %s38 = ssub.s32 %s25, %s37
      %s39 = ssub.s32 %s26, %s33
      %s40 = sor.u32 %s38, %s39
      %p41 = scmp.eq.s32.totalorder %s40, 0
      %s43 = sadd.s32 %s42, 1
      %s44 = scalar_select %p41, %s42, %s43
      %p47 = pneg %p41
      %p48 = scmp.eq.s32.totalorder %s18, 1
      %p49 = por %p47, %p48
      %p50 = scmp.ne.s32.totalorder %s42, %s45
      %p51 = scmp.eq.s32.totalorder %s18, 0
      %p52 = por %p50, %p51
      %p53 = scmp.ne.s32.totalorder %s42, %s45
      %p54 = scmp.eq.s32.totalorder %s23, 1
      %p55 = por %p53, %p54
      %p56 = scmp.ne.s32.totalorder %s45, %s46
      %p57 = scmp.eq.s32.totalorder %s23, 0
      %p58 = por %p56, %p57
      %p59 = scmp.ne.s32.totalorder %s45, %s46
      %p60 = scmp.eq.s32.totalorder %s24, 1
      %p61 = por %p59, %p60
      %p63 = scmp.ne.s32.totalorder %s46, %s62
      %p64 = scmp.eq.s32.totalorder %s24, 0
      %p65 = por %p63, %p64
      %s66 = ssub.s32 %s25, %s37
      %s67 = ssub.s32 %s26, %s33
      %s68 = sor.u32 %s66, %s67
      %p69 = scmp.eq.s32.totalorder %s68, 0
      %s71 = sadd.s32 %s70, 1
      %s72 = scalar_select %p69, %s70, %s71
      %p75 = pneg %p69
      %p76 = scmp.eq.s32.totalorder %s18, 1
      %p77 = por %p75, %p76
      %p78 = scmp.ne.s32.totalorder %s70, %s73
      %p79 = scmp.eq.s32.totalorder %s18, 0
      %p80 = por %p78, %p79
      %p81 = scmp.ne.s32.totalorder %s70, %s73
      %p82 = scmp.eq.s32.totalorder %s23, 1
      %p83 = por %p81, %p82
      %p84 = scmp.ne.s32.totalorder %s73, %s74
      %p85 = scmp.eq.s32.totalorder %s23, 0
      %p86 = por %p84, %p85
      %p87 = scmp.ne.s32.totalorder %s73, %s74
      %p88 = scmp.eq.s32.totalorder %s24, 1
      %p89 = por %p87, %p88
      %p91 = scmp.ne.s32.totalorder %s74, %s90
      %p92 = scmp.eq.s32.totalorder %s24, 0
      %p93 = por %p91, %p92
      %s94 = ssub.s32 %s25, %s37
      %s95 = ssub.s32 %s26, %s33
      %s96 = sor.u32 %s94, %s95
      %p97 = scmp.eq.s32.totalorder %s96, 0
      %s99 = sadd.s32 %s98, 1
      %s100 = scalar_select %p97, %s98, %s99
      %p103 = pneg %p97
      %p104 = scmp.eq.s32.totalorder %s18, 1
      %p105 = por %p103, %p104
      %p106 = scmp.ne.s32.totalorder %s98, %s101
      %p107 = scmp.eq.s32.totalorder %s18, 0
      %p108 = por %p106, %p107
      %p109 = scmp.ne.s32.totalorder %s98, %s101
      %p110 = scmp.eq.s32.totalorder %s23, 1
      %p111 = por %p109, %p110
      %p112 = scmp.ne.s32.totalorder %s101, %s102
      %p113 = scmp.eq.s32.totalorder %s23, 0
      %p114 = por %p112, %p113
      %p115 = scmp.ne.s32.totalorder %s101, %s102
      %p116 = scmp.eq.s32.totalorder %s24, 1
      %p117 = por %p115, %p116
      %p119 = scmp.ne.s32.totalorder %s102, %s118
      %p120 = scmp.eq.s32.totalorder %s24, 0
      %p121 = por %p119, %p120
      %s122 = ssub.s32 %s25, %s37
      %p123 = scmp.eq.s32.totalorder %s122, 0
      %s125 = sadd.s32 %s124, 1
      %s126 = scalar_select %p123, %s124, %s125
      %p129 = pneg %p123
      %p130 = scmp.eq.s32.totalorder %s18, 1
      %p131 = por %p129, %p130
      %p132 = scmp.ne.s32.totalorder %s124, %s127
      %p133 = scmp.eq.s32.totalorder %s18, 0
      %p134 = por %p132, %p133
      %p135 = scmp.ne.s32.totalorder %s124, %s127
      %p136 = scmp.eq.s32.totalorder %s23, 1
      %p137 = por %p135, %p136
      %p138 = scmp.ne.s32.totalorder %s127, %s128
      %p139 = scmp.eq.s32.totalorder %s23, 0
      %p140 = por %p138, %p139
      %p141 = scmp.ne.s32.totalorder %s127, %s128
      %p142 = scmp.eq.s32.totalorder %s24, 1
      %p143 = por %p141, %p142
      %p145 = scmp.ne.s32.totalorder %s128, %s144
      %p146 = scmp.eq.s32.totalorder %s24, 0
      %p147 = por %p145, %p146
      %p148 = scmp.le.s32.totalorder 1, %s18
      %p149 = scmp.lt.s32.totalorder %s18, 3
      %p150 = pnand %p148, %p149
      %p151 = pneg %p150
      // Predicated region
      $region9: #{tpu_custom_call.1} parent=5 // pred_check
        _
      $region10: #{tpu_custom_call.1} parent=5 // pred_check_branch
        %153 = sbr.rel (%p150) target = $region12
      $region11: #{tpu_custom_call.1} parent=5 // pred_region
        %s154 = ssub.s32 %s18, 1
      $region12: #{tpu_custom_call.1} parent=5 // pred_fallthru
        _
      %p155 = scmp.lt.s32.totalorder %s18, 2
      // Predicated region
      $region13: #{tpu_custom_call.1} parent=5 // pred_check
        %p156 = pneg %p155
      $region14: #{tpu_custom_call.1} parent=5 // pred_check_branch
        %158 = sbr.rel (%p156) target = $region16
      $region15: #{tpu_custom_call.1} parent=5 // pred_region
        // Predicated region
        $region17: #{tpu_custom_call.1} parent=15 // pred_check
          %p159 = pneg %p52
        $region18: #{tpu_custom_call.1} parent=15 // pred_check_branch
          %161 = sbr.rel (%p159) target = $region20
        $region19: #{tpu_custom_call.1} parent=15 // pred_region
          %s162 = sand.u32 %s42, 1
          %s163 = scalar_lea.sflag [#allocation3], %s162
          %s164 = sand.u32 %s42, 1
          %s165 = smul.addr %s164, 16
          %s166 = scalar_lea.vmem [#allocation2], %s165
          %s167 = smul.u32 4, %s26
          %169 = vsyncadd %s163, 0
          %s170 = smul.addr %s25, 4
          %s171 = sadd.s32 %s167, %s170
          %s172 = smul.addr %s171, 4
          %s173 = scalar_lea.hbm %s0, %s172
          %s175 = sshll.u32 %s173, 4
          %s176 = int_to_ptr.hbm [resolvable:$true] %s175
          %s177 = sshll.u32 %s166, 4
          %s178 = int_to_ptr.vmem [resolvable:$true] %s177
          %180 = dma.hbm_to_vmem [thread:$0]  %s176, 256, %s178, %s163
        $region20: #{tpu_custom_call.1} parent=15 // pred_fallthru
          _
        // Predicated region
        $region21: #{tpu_custom_call.1} parent=15 // pred_check
          %p181 = pneg %p80
        $region22: #{tpu_custom_call.1} parent=15 // pred_check_branch
          %183 = sbr.rel (%p181) target = $region24
        $region23: #{tpu_custom_call.1} parent=15 // pred_region
          %s184 = sand.u32 %s18, 1
          %s185 = scalar_lea.sflag [#allocation6], %s184
          %s186 = sand.u32 %s70, 1
          %s187 = smul.addr %s186, 4
          %s188 = scalar_lea.vmem [#allocation5], %s187
          %s189 = smul.u32 4, %s26
          %191 = vsyncadd %s185, 0
          %s192 = smul.addr %s25, 4
          %s193 = sadd.s32 %s189, %s192
          %s194 = scalar_lea.hbm %s1, %s193
          %s196 = sshll.u32 %s194, 4
          %s197 = int_to_ptr.hbm [resolvable:$true] %s196
          %s198 = sshll.u32 %s188, 4
          %s199 = int_to_ptr.vmem [resolvable:$true] %s198
          %201 = dma.hbm_to_vmem [thread:$0]  %s197, 64, %s199, %s185
        $region24: #{tpu_custom_call.1} parent=15 // pred_fallthru
          _
        // Predicated region
        $region25: #{tpu_custom_call.1} parent=15 // pred_check
          %p202 = pneg %p108
        $region26: #{tpu_custom_call.1} parent=15 // pred_check_branch
          %204 = sbr.rel (%p202) target = $region28
        $region27: #{tpu_custom_call.1} parent=15 // pred_region
          %s205 = sand.u32 %s18, 1
          %s206 = scalar_lea.sflag [#allocation6], %s205
          %s207 = sand.u32 %s98, 1
          %s208 = smul.addr %s207, 16
          %s209 = scalar_lea.vmem [#allocation7], %s208
          %s210 = smul.u32 4, %s26
          %212 = vsyncadd %s206, 0
          %s213 = smul.addr %s25, 4
          %s214 = sadd.s32 %s210, %s213
          %s215 = smul.addr %s214, 4
          %s216 = scalar_lea.hbm %s2, %s215
          %s218 = sshll.u32 %s216, 4
          %s219 = int_to_ptr.hbm [resolvable:$true] %s218
          %s220 = sshll.u32 %s209, 4
          %s221 = int_to_ptr.vmem [resolvable:$true] %s220
          %223 = dma.hbm_to_vmem [thread:$0]  %s219, 256, %s221, %s206
        $region28: #{tpu_custom_call.1} parent=15 // pred_fallthru
          _
      $region16: #{tpu_custom_call.1} parent=5 // pred_fallthru
        _
      %p224 = scmp.le.s32.totalorder 1, %s18
      %p225 = scmp.lt.s32.totalorder %s18, 3
      %p226 = pnand %p224, %p225
      %p227 = pneg %p226
      // Predicated region
      $region29: #{tpu_custom_call.1} parent=5 // pred_check
        _
      $region30: #{tpu_custom_call.1} parent=5 // pred_check_branch
        %229 = sbr.rel (%p226) target = $region32
      $region31: #{tpu_custom_call.1} parent=5 // pred_region
        %s230 = ssub.s32 %s18, 1
        %s231 = sand.u32 %s45, 1
        %s232 = scalar_lea.sflag [#allocation3], %s231
        %s233 = sand.u32 %s45, 1
        %s234 = smul.addr %s233, 16
        %s235 = scalar_lea.vmem [#allocation2], %s234
        // Predicated region
        $region33: #{tpu_custom_call.1} parent=31 // pred_check
          %p236 = pneg %p58
        $region34: #{tpu_custom_call.1} parent=31 // pred_check_branch
          %238 = sbr.rel (%p236) target = $region36
        $region35: #{tpu_custom_call.1} parent=31 // pred_region
          %240 = dma.done %s232, 256
        $region36: #{tpu_custom_call.1} parent=31 // pred_fallthru
          _
        %s241 = sand.u32 %s23, 1
        %s242 = scalar_lea.sflag [#allocation6], %s241
        %s243 = sand.u32 %s73, 1
        %s244 = smul.addr %s243, 4
        %s245 = scalar_lea.vmem [#allocation5], %s244
        // Predicated region
        $region37: #{tpu_custom_call.1} parent=31 // pred_check
          %p246 = pneg %p86
        $region38: #{tpu_custom_call.1} parent=31 // pred_check_branch
          %248 = sbr.rel (%p246) target = $region40
        $region39: #{tpu_custom_call.1} parent=31 // pred_region
          %250 = dma.done %s242, 64
        $region40: #{tpu_custom_call.1} parent=31 // pred_fallthru
          _
        %s251 = sand.u32 %s23, 1
        %s252 = scalar_lea.sflag [#allocation6], %s251
        %s253 = sand.u32 %s101, 1
        %s254 = smul.addr %s253, 16
        %s255 = scalar_lea.vmem [#allocation7], %s254
        // Predicated region
        $region41: #{tpu_custom_call.1} parent=31 // pred_check
          %p256 = pneg %p114
        $region42: #{tpu_custom_call.1} parent=31 // pred_check_branch
          %258 = sbr.rel (%p256) target = $region44
        $region43: #{tpu_custom_call.1} parent=31 // pred_region
          %260 = dma.done %s252, 256
        $region44: #{tpu_custom_call.1} parent=31 // pred_fallthru
          _
        %s261 = sand.u32 %s45, 1
        %s262 = scalar_lea.sflag [#allocation3], %s261
        %s263 = sand.u32 %s45, 1
        %s264 = smul.addr %s263, 16
        %s265 = scalar_lea.vmem [#allocation2], %s264
        %p266 = pneg %p58
        %p267 = pneg %p55
        %s268 = sand.u32 %s23, 1
        %s269 = scalar_lea.sflag [#allocation6], %s268
        %s270 = sand.u32 %s73, 1
        %s271 = smul.addr %s270, 4
        %s272 = scalar_lea.vmem [#allocation5], %s271
        %p273 = pneg %p86
        %p274 = pneg %p83
        %s275 = sand.u32 %s23, 1
        %s276 = scalar_lea.sflag [#allocation6], %s275
        %s277 = sand.u32 %s101, 1
        %s278 = smul.addr %s277, 16
        %s279 = scalar_lea.vmem [#allocation7], %s278
        %p280 = pneg %p114
        %p281 = pneg %p111
        %p282 = pneg %p140
        %p283 = pneg %p137
        %s284 = sand.u32 %s127, 1
        %s285 = scalar_lea.sflag [#allocation4], %s284
        %s286 = sand.u32 %s127, 1
        %s287 = smul.addr %s286, 4
        %s288 = scalar_lea.vmem [#allocation8], %s287
        %s289 = smul.u32 4, %s28
        %s290 = smul.u32 4, %s28
        %s291 = smul.u32 4, %s28
        %v292 = vld [vmem:[%s235] sm:$0xff]
        %v293 = vld [vmem:[%s235 + $0x8] sm:$0xff]
        %v294 = vld [vmem:[%s245] sm:$0xf]
        %v295 = vld [vmem:[%s255] sm:$0xff]
        %v296 = vld [vmem:[%s255 + $0x8] sm:$0xff]
        %299 = vst [vmem:[#allocation1] ss:$2 sm:$0xff] %v292
        %s300 = scalar_lea.vmem [#allocation1], 16
        %301 = vst [vmem:[%s300] ss:$2 sm:$0xff] %v293
        %v302 = vld.sshfl [vmem:[#allocation1] sm:$0xff pattern:$0x75316420]
        %v303 = vld.sshfl [vmem:[#allocation1 + $0x8] sm:$0xff pattern:$0x75316420]
        %v304 = vld.sshfl [vmem:[#allocation1 + $0x10] sm:$0xff pattern:$0x75316420]
        %v305 = vld.sshfl [vmem:[#allocation1 + $0x18] sm:$0xff pattern:$0x75316420]
        %vm310 = vcmask 1043456
        %v311 = vsel %vm310, %v302, -inf
        %v312 = vrot.slane %v311, 4
        %v313 = vmax.f32 %v311, %v312
        %v314 = vrot.slane %v313, 2
        %v315 = vmax.f32 %v313, %v314
        %v316 = vrot.slane %v315, 1
        %v317 = vmax.f32 %v315, %v316
        %v318 = vsel %vm310, %v303, -inf
        %v319 = vrot.slane %v318, 4
        %v320 = vmax.f32 %v318, %v319
        %v321 = vrot.slane %v320, 2
        %v322 = vmax.f32 %v320, %v321
        %v323 = vrot.slane %v322, 1
        %v324 = vmax.f32 %v322, %v323
        %v325 = vsel %vm310, %v304, -inf
        %v326 = vrot.slane %v325, 4
        %v327 = vmax.f32 %v325, %v326
        %v328 = vrot.slane %v327, 2
        %v329 = vmax.f32 %v327, %v328
        %v330 = vrot.slane %v329, 1
        %v331 = vmax.f32 %v329, %v330
        %v332 = vsel %vm310, %v305, -inf
        %v333 = vrot.slane %v332, 4
        %v334 = vmax.f32 %v332, %v333
        %v335 = vrot.slane %v334, 2
        %v336 = vmax.f32 %v334, %v335
        %v337 = vrot.slane %v336, 1
        %v338 = vmax.f32 %v336, %v337
        %v343 = vrot.slane %v324, 4
        %v344 = vrot.slane %v338, 4
        %v345 = vsel %vm310, %v317, %v343
        %v346 = vsel %vm310, %v331, %v344
        %v349 = vsub.f32 %v292, %v345
        %v350 = vsub.f32 %v293, %v346
        %v351 = vmul.f32 %v349, 1.442695
        %v352 = vpow.pop %v351
        %v353 = vmul.f32 %v350, 1.442695
        %v354 = vpow.pop %v353
        %357 = vst [vmem:[#allocation1] ss:$2 sm:$0xff] %v352
        %s358 = scalar_lea.vmem [#allocation1], 16
        %359 = vst [vmem:[%s358] ss:$2 sm:$0xff] %v354
        %v360 = vld.sshfl [vmem:[#allocation1] sm:$0xff pattern:$0x75316420]
        %v361 = vld.sshfl [vmem:[#allocation1 + $0x8] sm:$0xff pattern:$0x75316420]
        %v362 = vld.sshfl [vmem:[#allocation1 + $0x10] sm:$0xff pattern:$0x75316420]
        %v363 = vld.sshfl [vmem:[#allocation1 + $0x18] sm:$0xff pattern:$0x75316420]
        %v368 = vsel %vm310, %v360, 0.0
        %v369 = vrot.slane %v368, 4
        %v370 = vadd.f32 %v368, %v369
        %v371 = vrot.slane %v370, 2
        %v372 = vadd.f32 %v370, %v371
        %v373 = vrot.slane %v372, 1
        %v374 = vadd.f32 %v372, %v373
        %v375 = vsel %vm310, %v361, 0.0
        %v376 = vrot.slane %v375, 4
        %v377 = vadd.f32 %v375, %v376
        %v378 = vrot.slane %v377, 2
        %v379 = vadd.f32 %v377, %v378
        %v380 = vrot.slane %v379, 1
        %v381 = vadd.f32 %v379, %v380
        %v382 = vsel %vm310, %v362, 0.0
        %v383 = vrot.slane %v382, 4
        %v384 = vadd.f32 %v382, %v383
        %v385 = vrot.slane %v384, 2
        %v386 = vadd.f32 %v384, %v385
        %v387 = vrot.slane %v386, 1
        %v388 = vadd.f32 %v386, %v387
        %v389 = vsel %vm310, %v363, 0.0
        %v390 = vrot.slane %v389, 4
        %v391 = vadd.f32 %v389, %v390
        %v392 = vrot.slane %v391, 2
        %v393 = vadd.f32 %v391, %v392
        %v394 = vrot.slane %v393, 1
        %v395 = vadd.f32 %v393, %v394
        %v400 = vrot.slane %v381, 4
        %v401 = vrot.slane %v395, 4
        %v402 = vsel %vm310, %v374, %v400
        %v403 = vsel %vm310, %v388, %v401
        %v406 = vrcp.pop %v402
        %v407 = vmul.f32 %v402, %v406
        %v408 = vsub.f32 1.0, %v407
        %v409 = vmul.f32 %v406, %v408
        %v410 = vadd.f32 %v406, %v409
        %vm411 = vweird.f32 %v402
        %vm412 = vweird.f32 %v406
        %vm413 = vmor %vm411, %vm412
        %v414 = vsel %vm413, %v406, %v410
        %v415 = vand.u32 2147483647, %v402
        %vm416 = vcmp.eq.f32.partialorder %v415, 8.507059e+37
        %v417 = vand.u32 %v402, 2147483648
        %v418 = vor.u32 1.1754944e-38, %v417
        %v419 = vsel %vm416, %v418, %v414
        %v420 = vmul.f32 %v352, %v419
        %v421 = vrcp.pop %v403
        %v422 = vmul.f32 %v403, %v421
        %v423 = vsub.f32 1.0, %v422
        %v424 = vmul.f32 %v421, %v423
        %v425 = vadd.f32 %v421, %v424
        %vm426 = vweird.f32 %v403
        %vm427 = vweird.f32 %v421
        %vm428 = vmor %vm426, %vm427
        %v429 = vsel %vm428, %v421, %v425
        %v430 = vand.u32 2147483647, %v403
        %vm431 = vcmp.eq.f32.partialorder %v430, 8.507059e+37
        %v432 = vand.u32 %v403, 2147483648
        %v433 = vor.u32 1.1754944e-38, %v432
        %v434 = vsel %vm431, %v433, %v429
        %v435 = vmul.f32 %v354, %v434
        %v436 = vlaneseq
        %v437 = vshrl.u32 %v436, 7
        %v438 = vperm.slane %v294, 0
        %v439 = vperm.slane %v294, 1
        %v440 = vperm.slane %v294, 2
        %v441 = vperm.slane %v294, 3
        %vm442 = vcmp.eq.s32.totalorder %v437, %v438
        %vm443 = vcmp.eq.s32.totalorder %v437, %v439
        %vm444 = vcmp.eq.s32.totalorder %v437, %v440
        %vm445 = vcmp.eq.s32.totalorder %v437, %v441
        %v446 = vsel %vm442, 1, 0
        %v447 = vsel %vm443, 1, 0
        %v448 = vsel %vm444, 1, 0
        %v449 = vsel %vm445, 1, 0
        %v450 = vcvt.s32.f32 %v446
        %v451 = vcvt.s32.f32 %v447
        %v452 = vcvt.s32.f32 %v448
        %v453 = vcvt.s32.f32 %v449
        %v458 = vrot.slane %v451, 4
        %v459 = vrot.slane %v453, 4
        %v460 = vsel %vm310, %v450, %v458
        %v461 = vsel %vm310, %v452, %v459
        %v464 = vmul.f32 %v420, %v460
        %v465 = vmul.f32 %v435, %v461
        %468 = vst [vmem:[#allocation1] ss:$2 sm:$0xff] %v464
        %s469 = scalar_lea.vmem [#allocation1], 16
        %470 = vst [vmem:[%s469] ss:$2 sm:$0xff] %v465
        %v471 = vld.sshfl [vmem:[#allocation1] sm:$0xff pattern:$0x75316420]
        %v472 = vld.sshfl [vmem:[#allocation1 + $0x8] sm:$0xff pattern:$0x75316420]
        %v473 = vld.sshfl [vmem:[#allocation1 + $0x10] sm:$0xff pattern:$0x75316420]
        %v474 = vld.sshfl [vmem:[#allocation1 + $0x18] sm:$0xff pattern:$0x75316420]
        %v479 = vsel %vm310, %v471, 0.0
        %v480 = vsel %vm310, %v472, 0.0
        %v481 = vadd.f32 %v479, %v480
        %v482 = vsel %vm310, %v473, 0.0
        %v483 = vadd.f32 %v481, %v482
        %v484 = vsel %vm310, %v474, 0.0
        %v485 = vadd.f32 %v483, %v484
        %486 = vadd.xlane.f32.xlu0 %v485
        %v487 = vpop.xlane.xlu0 %486
        %490 = vst [vmem:[#allocation1] ss:$2 sm:$0xff] %v420
        %s491 = scalar_lea.vmem [#allocation1], 16
        %492 = vst [vmem:[%s491] ss:$2 sm:$0xff] %v435
        %v493 = vld.sshfl [vmem:[#allocation1] sm:$0xff pattern:$0x75316420]
        %v494 = vld.sshfl [vmem:[#allocation1 + $0x8] sm:$0xff pattern:$0x75316420]
        %v495 = vld.sshfl [vmem:[#allocation1 + $0x10] sm:$0xff pattern:$0x75316420]
        %v496 = vld.sshfl [vmem:[#allocation1 + $0x18] sm:$0xff pattern:$0x75316420]
        %v501 = vsel %vm310, %v493, 0.0
        %v502 = vsel %vm310, %v494, 0.0
        %v503 = vadd.f32 %v501, %v502
        %v504 = vsel %vm310, %v495, 0.0
        %v505 = vadd.f32 %v503, %v504
        %v506 = vsel %vm310, %v496, 0.0
        %v507 = vadd.f32 %v505, %v506
        %508 = vadd.xlane.f32.xlu0 %v507
        %v509 = vpop.xlane.xlu0 %508
        %v510 = vsub.f32 %v509, %v487
        %v511 = vsel %vm310, %v450, 0.0
        %v512 = vsel %vm310, %v451, 0.0
        %v513 = vadd.f32 %v511, %v512
        %v514 = vsel %vm310, %v452, 0.0
        %v515 = vadd.f32 %v513, %v514
        %v516 = vsel %vm310, %v453, 0.0
        %v517 = vadd.f32 %v515, %v516
        %518 = vadd.xlane.f32.xlu0 %v517
        %v519 = vpop.xlane.xlu0 %518
        %v520 = vsub.f32 %v519, %v487
        %v521 = vmul.f32 %v420, %v295
        %v522 = vmul.f32 %v435, %v296
        %525 = vst [vmem:[#allocation1] ss:$2 sm:$0xff] %v521
        %s526 = scalar_lea.vmem [#allocation1], 16
        %527 = vst [vmem:[%s526] ss:$2 sm:$0xff] %v522
        %v528 = vld.sshfl [vmem:[#allocation1] sm:$0xff pattern:$0x75316420]
        %v529 = vld.sshfl [vmem:[#allocation1 + $0x8] sm:$0xff pattern:$0x75316420]
        %v530 = vld.sshfl [vmem:[#allocation1 + $0x10] sm:$0xff pattern:$0x75316420]
        %v531 = vld.sshfl [vmem:[#allocation1 + $0x18] sm:$0xff pattern:$0x75316420]
        %v536 = vsel %vm310, %v528, 0.0
        %v537 = vsel %vm310, %v529, 0.0
        %v538 = vadd.f32 %v536, %v537
        %v539 = vsel %vm310, %v530, 0.0
        %v540 = vadd.f32 %v538, %v539
        %v541 = vsel %vm310, %v531, 0.0
        %v542 = vadd.f32 %v540, %v541
        %543 = vadd.xlane.f32.xlu0 %v542
        %v544 = vpop.xlane.xlu0 %543
        %vm545 = vcmask 7168
        %v546 = vsel %vm545, %v487, %v510
        %vm547 = vcmask 15360
        %v548 = vsel %vm547, %v546, %v520
        %vm549 = vcmask 23552
        %v550 = vsel %vm549, %v548, %v544
        %p551 = scmp.eq.s32.totalorder %s28, 0
        // Predicated region
        $region45: #{tpu_custom_call.1} parent=31 // pred_check
          %p552 = pneg %p551
        $region46: #{tpu_custom_call.1} parent=31 // pred_check_branch
          %554 = sbr.rel (%p552) target = $region48
        $region47: #{tpu_custom_call.1} parent=31 // pred_region
          %vm555 = vcmask 27648
          %556 = vst.msk [vmem:[%s288] sm:$0xf] %vm555, 0.0
        $region48: #{tpu_custom_call.1} parent=31 // pred_fallthru
          _
        %v557 = vld [vmem:[%s288] sm:$0xf]
        %v558 = vadd.f32 %v557, %v550
        %vm559 = vcmask 27648
        %560 = vst.msk [vmem:[%s288] sm:$0xf] %vm559, %v558
        %s561 = sand.u32 %s127, 1
        %s562 = scalar_lea.sflag [#allocation4], %s561
        %s563 = sand.u32 %s127, 1
        %s564 = smul.addr %s563, 4
        %s565 = scalar_lea.vmem [#allocation8], %s564
        // Predicated region
        $region49: #{tpu_custom_call.1} parent=31 // pred_check
          %p566 = pneg %p137
        $region50: #{tpu_custom_call.1} parent=31 // pred_check_branch
          %568 = sbr.rel (%p566) target = $region52
        $region51: #{tpu_custom_call.1} parent=31 // pred_region
          %570 = vsyncadd %s562, 0
          %s571 = smul.addr %s27, 4
          %s572 = scalar_lea.hbm %s3, %s571
          %s574 = sshll.u32 %s565, 4
          %s575 = int_to_ptr.vmem [resolvable:$true] %s574
          %s576 = sshll.u32 %s572, 4
          %s577 = int_to_ptr.hbm [resolvable:$true] %s576
          %579 = dma.vmem_to_hbm [thread:$0]  %s575, 64, %s577, %s562
        $region52: #{tpu_custom_call.1} parent=31 // pred_fallthru
          _
      $region32: #{tpu_custom_call.1} parent=5 // pred_fallthru
        _
      %p580 = scmp.le.s32.totalorder 2, %s18
      // Predicated region
      $region53: #{tpu_custom_call.1} parent=5 // pred_check
        %p581 = pneg %p580
      $region54: #{tpu_custom_call.1} parent=5 // pred_check_branch
        %583 = sbr.rel (%p581) target = $region56
      $region55: #{tpu_custom_call.1} parent=5 // pred_region
        %s584 = ssub.s32 %s18, 2
        // Predicated region
        $region57: #{tpu_custom_call.1} parent=55 // pred_check
          %p585 = pneg %p143
        $region58: #{tpu_custom_call.1} parent=55 // pred_check_branch
          %587 = sbr.rel (%p585) target = $region60
        $region59: #{tpu_custom_call.1} parent=55 // pred_region
          %s588 = sand.u32 %s128, 1
          %s589 = scalar_lea.sflag [#allocation4], %s588
          %s590 = sand.u32 %s128, 1
          %s591 = smul.addr %s590, 4
          %s592 = scalar_lea.vmem [#allocation8], %s591
          %594 = dma.done %s589, 64
        $region60: #{tpu_custom_call.1} parent=55 // pred_fallthru
          _
      $region56: #{tpu_custom_call.1} parent=5 // pred_fallthru
        _
    $region6: #{tpu_custom_call.1} parent=1 // loop_footer
      %s22 = sadd.s32 1, %s18
    $region7: #{tpu_custom_call.1} parent=1 // loop_footer_branch
      %17 = sbr.rel target = $region3
    $region8: #{tpu_custom_call.1} parent=1 // loop_exit
      _
    %595 = vsyncpa [#allocation3], 1
    %s596 = scalar_lea.sflag [#allocation3], 1
    %597 = vsyncpa %s596, 1
    %598 = vsyncpa [#allocation6], 1
    %s599 = scalar_lea.sflag [#allocation6], 1
    %600 = vsyncpa %s599, 1
    %601 = vsyncpa [#allocation4], 1
    %s602 = scalar_lea.sflag [#allocation4], 1
    %603 = vsyncpa %s602, 1

</llo_original>
